<compile_context>
chip_gen: v7x
topology: tpu7x:2x2x1
jax: 0.10.0
libtpu: 0.0.40
codegen_flags: <defaults>
</compile_context>

<pallas_src>
import functools
import math

import jax
import jax.numpy as jnp
from jax.experimental import pallas as pl
from jax.experimental.pallas import tpu as pltpu


def _lora_kernel(x_ref, a_ref, b_ref, o_ref, *, scaling):
    # x_ref: (tile_m, in_features)   a_ref: (in_features, rank)
    # b_ref: (rank, out_features)    o_ref: (tile_m, out_features)
    xa = jnp.dot(x_ref[...], a_ref[...], preferred_element_type=jnp.float32)
    # Apply the scale on the small (tile_m, rank) tensor (out_features/rank
    # fewer VPU multiplies than scaling the output), then feed the MXU again
    # in the streaming dtype (bf16 when bf16 inputs are used).
    xa = (xa * scaling).astype(a_ref.dtype)
    y = jnp.dot(xa, b_ref[...], preferred_element_type=jnp.float32)
    o_ref[...] = y.astype(o_ref.dtype)


def lora_forward(x, lora_A, lora_B, *, alpha, rank, tile_m=512,
                 compute_dtype=None):
    """Apply LoRA: x @ lora_A @ lora_B * (alpha / rank).

    x:        [..., in_features]  (leading dims are flattened to M rows)
    lora_A:   [in_features, rank]
    lora_B:   [rank, out_features]
    compute_dtype: e.g. jnp.bfloat16 to halve HBM traffic (f32 accumulation
                   on the MXU either way). None keeps the input dtype.
    """
    scaling = alpha / rank
    in_features, r = lora_A.shape
    r2, out_features = lora_B.shape
    assert r == rank and r2 == rank, "lora_A/lora_B rank mismatch"

    if compute_dtype is not None:
        x = x.astype(compute_dtype)
        lora_A = lora_A.astype(compute_dtype)
        lora_B = lora_B.astype(compute_dtype)

    lead_shape = x.shape[:-1]
    M = int(math.prod(lead_shape)) if lead_shape else 1
    x2d = x.reshape(M, in_features)

    # Clamp tile_m so small inputs use a single block; keep it a multiple of 8
    # (sublane). Large M keeps the requested (multiple-of-128) tile.
    tile_m = max(8, min(int(tile_m), pl.cdiv(M, 8) * 8))
    tile_m = pl.cdiv(tile_m, 8) * 8
    grid = (pl.cdiv(M, tile_m),)

    # Size the scoped VMEM limit from the actual footprint:
    #   double-buffered x tile + y tile, plus (double-buffered) A and B.
    itemsize = jnp.dtype(x2d.dtype).itemsize
    est_bytes = itemsize * (
        2 * tile_m * in_features
        + 2 * tile_m * out_features
        + 2 * in_features * rank
        + 2 * rank * out_features
    )
    # Keep within the default scoped limit when possible; never exceed 64 MiB
    # (v7x physical VMEM) to stay portable across generations.
    vmem_limit = max(32 << 20, min(int(1.5 * est_bytes), 64 << 20))

    out = pl.pallas_call(
        functools.partial(_lora_kernel, scaling=scaling),
        out_shape=jax.ShapeDtypeStruct((M, out_features), x2d.dtype),
        grid_spec=pltpu.PrefetchScalarGridSpec(
            num_scalar_prefetch=0,
            grid=grid,
            in_specs=[
                # x tile walks along M; A and B are resident (constant index_map
                # -> fetched once; Mosaic does not re-DMA unchanged blocks).
                pl.BlockSpec((tile_m, in_features), lambda i: (i, 0)),
                pl.BlockSpec((in_features, rank), lambda i: (0, 0)),
                pl.BlockSpec((rank, out_features), lambda i: (0, 0)),
            ],
            out_specs=pl.BlockSpec((tile_m, out_features), lambda i: (i, 0)),
        ),
        compiler_params=pltpu.CompilerParams(
            dimension_semantics=("parallel",),
            vmem_limit_bytes=vmem_limit,
        ),
    )(x2d, lora_A, lora_B)

    return out.reshape(*lead_shape, out_features)


# TODO(synk): train-mode dropout (p > 0) is not implemented; the module default
# dropout=0.0 (and eval semantics) makes it the identity, which is what this
# kernel computes. pltpu.prng_seed/prng_random_bits could add it if needed.


if __name__ == "__main__":
    # Small shapes consistent with the module's forward: batch=2, seq=8, hidden=32.
    batch, seq, in_features, out_features = 2, 8, 32, 32
    rank, alpha = 16, 16

    key = jax.random.PRNGKey(0)
    kx, ka, kb = jax.random.split(key, 3)

    x = jax.random.normal(kx, (batch, seq, in_features), dtype=jnp.float32)

    # lora_A: kaiming_uniform(a=sqrt(5)) -> uniform in [-1/sqrt(rank), 1/sqrt(rank)]
    # (PyTorch fan_in = size(1) = rank for a (in_features, rank) tensor).
    bound = 1.0 / math.sqrt(rank)
    lora_A = jax.random.uniform(
        ka, (in_features, rank), minval=-bound, maxval=bound, dtype=jnp.float32
    )
    # NOTE: the reference init zeros lora_B (so y == 0). We use a small random
    # lora_B here so the kernel result is non-trivially verifiable.
    lora_B = 0.02 * jax.random.normal(kb, (rank, out_features), dtype=jnp.float32)

    scaling = alpha / rank

    # --- f32 path: tight correctness check against the PyTorch math. ---
    y = lora_forward(x, lora_A, lora_B, alpha=alpha, rank=rank)
    y = jax.block_until_ready(y)
    y_ref = (x.reshape(-1, in_features) @ lora_A @ lora_B * scaling).reshape(
        batch, seq, out_features
    )
    assert y.shape == (batch, seq, out_features)
    assert jnp.allclose(y, y_ref, atol=1e-5, rtol=1e-5), "f32 mismatch vs JAX reference"

    # --- bf16 fast path (recommended for production shapes): looser check. ---
    y_bf = lora_forward(
        x, lora_A, lora_B, alpha=alpha, rank=rank, compute_dtype=jnp.bfloat16
    )
    y_bf = jax.block_until_ready(y_bf)
    xb = x.reshape(-1, in_features).astype(jnp.bfloat16)
    ab = lora_A.astype(jnp.bfloat16)
    bb = lora_B.astype(jnp.bfloat16)
    xa_ref = (
        jnp.dot(xb, ab, preferred_element_type=jnp.float32) * scaling
    ).astype(jnp.bfloat16)
    y_bf_ref = (
        jnp.dot(xa_ref, bb, preferred_element_type=jnp.float32)
        .astype(jnp.bfloat16)
        .reshape(batch, seq, out_features)
    )
    assert y_bf.dtype == jnp.bfloat16
    assert jnp.allclose(
        y_bf.astype(jnp.float32), y_bf_ref.astype(jnp.float32), atol=2e-2, rtol=2e-2
    ), "bf16 mismatch vs JAX reference"

    print("KERNEL_OK")
</pallas_src>

<mosaic_0001>
module attributes {stable_mosaic.version = 11 : i64} {
  func.func @_lora_kernel(%arg0: i32, %arg1: memref<16x32xf32, #tpu.memory_space<vmem>>, %arg2: memref<32x16xf32, #tpu.memory_space<vmem>>, %arg3: memref<16x32xf32, #tpu.memory_space<vmem>>, %arg4: memref<16x32xf32, #tpu.memory_space<vmem>>) attributes {dimension_semantics = [#tpu.dimension_semantics<parallel>], iteration_bounds = array<i64: 1>, scalar_prefetch = 0 : i64, scratch_operands = 0 : i64, tpu.core_type = #tpu.core_type<tc>, window_params = [{transform_indices = @transform_0, window_bounds = array<i64: 16, 32>}, {pipeline_mode = #tpu.pipeline_mode<synchronous>, transform_indices = @transform_1, window_bounds = array<i64: 32, 16>}, {pipeline_mode = #tpu.pipeline_mode<synchronous>, transform_indices = @transform_2, window_bounds = array<i64: 16, 32>}, {transform_indices = @transform_3, window_bounds = array<i64: 16, 32>}]} {
    %c0 = arith.constant 0 : index
    %c0_0 = arith.constant 0 : index
    %0 = vector.load %arg1[%c0, %c0_0] : memref<16x32xf32, #tpu.memory_space<vmem>>, vector<16x32xf32>
    %c0_1 = arith.constant 0 : index
    %c0_2 = arith.constant 0 : index
    %1 = vector.load %arg2[%c0_1, %c0_2] : memref<32x16xf32, #tpu.memory_space<vmem>>, vector<32x16xf32>
    %cst = arith.constant dense<0.000000e+00> : vector<16x16xf32>
    %2 = tpu.matmul %0, %1, %cst {dimension_numbers = #tpu.dot_dimension_numbers<[1], [0], [0], [1], [0, 0, 1, 1], [], []>} : vector<16x32xf32>, vector<32x16xf32>, vector<16x16xf32> -> vector<16x16xf32>
    %cst_3 = arith.constant 1.000000e+00 : f32
    %3 = vector.broadcast %cst_3 : f32 to vector<16x16xf32>
    %4 = arith.mulf %2, %3 : vector<16x16xf32>
    %c0_4 = arith.constant 0 : index
    %c0_5 = arith.constant 0 : index
    %5 = vector.load %arg3[%c0_4, %c0_5] : memref<16x32xf32, #tpu.memory_space<vmem>>, vector<16x32xf32>
    %cst_6 = arith.constant dense<0.000000e+00> : vector<16x32xf32>
    %6 = tpu.matmul %4, %5, %cst_6 {dimension_numbers = #tpu.dot_dimension_numbers<[1], [0], [0], [1], [0, 0, 1, 1], [], []>} : vector<16x16xf32>, vector<16x32xf32>, vector<16x32xf32> -> vector<16x32xf32>
    %c0_7 = arith.constant 0 : index
    %c0_8 = arith.constant 0 : index
    %7 = vector.load %arg4[%c0_7, %c0_8] : memref<16x32xf32, #tpu.memory_space<vmem>>, vector<16x32xf32>
    tpu.vector_store %arg4[%c0_7, %c0_8], %6 {strides = array<i32>} : memref<16x32xf32, #tpu.memory_space<vmem>>, vector<16x32xf32>,
    return
  }
  func.func @transform_0(%arg0: i32) -> (i32, i32) {
    %c0_i32 = arith.constant 0 : i32
    %c0_i32_0 = arith.constant 0 : i32
    return %arg0, %c0_i32 : i32, i32
  }
  func.func @transform_1(%arg0: i32) -> (i32, i32) {
    %c0_i32 = arith.constant 0 : i32
    %c0_i32_0 = arith.constant 0 : i32
    %c0_i32_1 = arith.constant 0 : i32
    return %c0_i32, %c0_i32_0 : i32, i32
  }
  func.func @transform_2(%arg0: i32) -> (i32, i32) {
    %c0_i32 = arith.constant 0 : i32
    %c0_i32_0 = arith.constant 0 : i32
    %c0_i32_1 = arith.constant 0 : i32
    return %c0_i32, %c0_i32_0 : i32, i32
  }
  func.func @transform_3(%arg0: i32) -> (i32, i32) {
    %c0_i32 = arith.constant 0 : i32
    %c0_i32_0 = arith.constant 0 : i32
    return %arg0, %c0_i32 : i32, i32
  }
}

</mosaic_0001>

<llo_original>
// kernel: tpu_custom_call.1
$region0: #{tpu_custom_call.1}
  #allocation0 [shape = 'u32[]', space=smem, size = 0x4, offset = 0x4, fixed_abs, tag = 'smem constant byte address 0x4 - core index']
  #allocation1 [shape = 'u32[144,128]{1,0:T(1,128)}', space=vmem, size = 0x12000, scoped, tag = 'internal scratch']
  %s0 = inlined_call_operand.vmem [shape: f32[16,32], index: 0, kind: input, shape index: {}]
  %s1 = inlined_call_operand.vmem [shape: f32[32,16], index: 1, kind: input, shape index: {}]
  %s2 = inlined_call_operand.vmem [shape: f32[16,32], index: 2, kind: input, shape index: {}]
  %s3 = inlined_call_operand.hbm [shape: f32[16,32], index: 3, kind: output, shape index: {}]
  %s4 = sld [smem:[#allocation0]]
  $region22: #{tpu_custom_call.1} parent=0
    _
  %s6 = ssub.s32 1, %s4
  %s7 = scalar_select 0, %s6, %s4
  $region1: #{tpu_custom_call.1} parent=0
    #allocation2 [shape = 'u8[8192]{0}', space=vmem, size = 0x2000, scoped, tag = 'output window, operand 0, single buffered']
    #allocation3 [shape = 's32[1]{0}', space=sflag, size = 0x4, scoped, tag = 'scoped memory for tpu_custom_call.1']
    %8 = vsyncpa [#allocation3], 0
    // Predicated region
    $region2: #{tpu_custom_call.1} parent=1 // pred_check
      _
    $region3: #{tpu_custom_call.1} parent=1 // pred_check_branch
      %10 = sbr.rel (0) target = $region5
    $region4: #{tpu_custom_call.1} parent=1 // pred_region
      _
    $region5: #{tpu_custom_call.1} parent=1 // pred_fallthru
      _
    // Predicated region
    $region6: #{tpu_custom_call.1} parent=1 // pred_check
      _
    $region7: #{tpu_custom_call.1} parent=1 // pred_check_branch
      %12 = sbr.rel (0) target = $region9
    $region8: #{tpu_custom_call.1} parent=1 // pred_region
      _
    $region9: #{tpu_custom_call.1} parent=1 // pred_fallthru
      _
    // Predicated region
    $region10: #{tpu_custom_call.1} parent=1 // pred_check
      _
    $region11: #{tpu_custom_call.1} parent=1 // pred_check_branch
      %14 = sbr.rel (0) target = $region13
    $region12: #{tpu_custom_call.1} parent=1 // pred_region
      _
    $region13: #{tpu_custom_call.1} parent=1 // pred_fallthru
      _
    %v15 = vld [vmem:[%s0] sm:$0xff]
    %v16 = vld [vmem:[%s0 + $0x8] sm:$0xff]
    %v17 = vld [vmem:[%s1] sm:$0xff]
    %v18 = vld [vmem:[%s1 + $0x8] sm:$0xff]
    %v19 = vld [vmem:[%s1 + $0x10] sm:$0xff]
    %v20 = vld [vmem:[%s1 + $0x18] sm:$0xff]
    %vm21 = vcmask 261120
    %v23 = vsel %vm21, %v15, 0
    %v26 = vsel %vm21, %v16, 0
    %28 = vmatprep.subr.mxu0 0.0
    %29 = vmatpush1.msra.mxu0 %v17
    %30 = vmatprep.subr.mxu0 0.0
    %31 = vmatpush1.msra.mxu0 %v18
    %32 = vmatprep.subr.mxu0 0.0
    %33 = vmatpush1.msra.mxu0 %v19
    %34 = vmatprep.subr.mxu0 0.0
    %35 = vmatpush1.msra.mxu0 %v20
    %36 = vmatprep.subr.mxu0 0.0
    %37 = vmatpush1.msra.mxu0 0.0
    %38 = vmatprep.subr.mxu0 0.0
    %39 = vmatpush1.msra.mxu0 0.0
    %40 = vmatprep.subr.mxu0 0.0
    %41 = vmatpush1.msra.mxu0 0.0
    %42 = vmatprep.subr.mxu0 0.0
    %43 = vmatpush1.msra.mxu0 0.0
    %44 = vmatprep.subr.mxu0 0.0
    %45 = vmatpush1.msra.mxu0 0.0
    %46 = vmatprep.subr.mxu0 0.0
    %47 = vmatpush1.msra.mxu0 0.0
    %48 = vmatprep.subr.mxu0 0.0
    %49 = vmatpush1.msra.mxu0 0.0
    %50 = vmatprep.subr.mxu0 0.0
    %51 = vmatpush1.msra.mxu0 0.0
    %52 = vmatprep.subr.mxu0 0.0
    %53 = vmatpush1.msra.mxu0 0.0
    %54 = vmatprep.subr.mxu0 0.0
    %55 = vmatpush1.msra.mxu0 0.0
    %56 = vmatprep.subr.mxu0 0.0
    %57 = vmatpush1.msra.mxu0 0.0
    %58 = vmatprep.subr.mxu0 0.0
    %59 = vmatpush1.msra.mxu0 0.0
    %60 = vmatprep.subr.mxu0 0.0
    %61 = vmatpush1.msra.mxu0 0.0
    %62 = vmatprep.subr.mxu0 0.0
    %63 = vmatpush1.msra.mxu0 0.0
    %64 = vmatprep.subr.mxu0 0.0
    %65 = vmatpush1.msra.mxu0 0.0
    %66 = vmatprep.subr.mxu0 0.0
    %67 = vmatpush1.msra.mxu0 0.0
    %68 = vmatprep.subr.mxu0 0.0
    %69 = vmatpush1.msra.mxu0 0.0
    %70 = vmatprep.subr.mxu0 0.0
    %71 = vmatpush1.msra.mxu0 0.0
    %72 = vmatprep.subr.mxu0 0.0
    %73 = vmatpush1.msra.mxu0 0.0
    %74 = vmatprep.subr.mxu0 0.0
    %75 = vmatpush1.msra.mxu0 0.0
    %76 = vmatprep.subr.mxu0 0.0
    %77 = vmatpush1.msra.mxu0 0.0
    %78 = vmatprep.subr.mxu0 0.0
    %79 = vmatpush1.msra.mxu0 0.0
    %80 = vmatprep.subr.mxu0 0.0
    %81 = vmatpush1.msra.mxu0 0.0
    %82 = vmatprep.subr.mxu0 0.0
    %83 = vmatpush1.msra.mxu0 0.0
    %84 = vmatprep.subr.mxu0 0.0
    %85 = vmatpush1.msra.mxu0 0.0
    %86 = vmatprep.subr.mxu0 0.0
    %87 = vmatpush1.msra.mxu0 0.0
    %88 = vmatprep.subr.mxu0 0.0
    %89 = vmatpush1.msra.mxu0 0.0
    %90 = vmatprep.subr.mxu0 0.0
    %91 = vmatpush1.msra.mxu0 0.0
    %92 = vmatprep.mubr.f32.mxu0 0.0
    %93 = vmatmul.mubr.f32.gmra.mrb[0].mxu0 %v23
    %v94 = vpop.f32.mrb[0].mxu0
    %v95 = vadd.f32 0.0, %v94
    %v96 = vpop.f32.mrb[0].mxu0
    %97 = vmatprep.mubr.f32.mxu0 0.0
    %98 = vmatmul.mubr.f32.gmra.mrb[0].mxu0 %v26
    %v99 = vpop.f32.mrb[0].mxu0
    %v100 = vadd.f32 0.0, %v99
    %v101 = vpop.f32.mrb[0].mxu0
    %102 = vdwg.mxu0
    %v103 = vld [vmem:[%s2] sm:$0xff]
    %v104 = vld [vmem:[%s2 + $0x8] sm:$0xff]
    %vm105 = vcmask 130048
    %v107 = vsel %vm105, %v95, 0
    %v110 = vsel %vm105, %v100, 0
    %112 = vmatprep.subr.mxu0 0.0
    %113 = vmatpush1.msra.mxu0 %v103
    %114 = vmatprep.subr.mxu0 0.0
    %115 = vmatpush1.msra.mxu0 %v104
    %116 = vmatprep.subr.mxu0 0.0
    %117 = vmatpush1.msra.mxu0 0.0
    %118 = vmatprep.subr.mxu0 0.0
    %119 = vmatpush1.msra.mxu0 0.0
    %120 = vmatprep.subr.mxu0 0.0
    %121 = vmatpush1.msra.mxu0 0.0
    %122 = vmatprep.subr.mxu0 0.0
    %123 = vmatpush1.msra.mxu0 0.0
    %124 = vmatprep.subr.mxu0 0.0
    %125 = vmatpush1.msra.mxu0 0.0
    %126 = vmatprep.subr.mxu0 0.0
    %127 = vmatpush1.msra.mxu0 0.0
    %128 = vmatprep.subr.mxu0 0.0
    %129 = vmatpush1.msra.mxu0 0.0
    %130 = vmatprep.subr.mxu0 0.0
    %131 = vmatpush1.msra.mxu0 0.0
    %132 = vmatprep.subr.mxu0 0.0
    %133 = vmatpush1.msra.mxu0 0.0
    %134 = vmatprep.subr.mxu0 0.0
    %135 = vmatpush1.msra.mxu0 0.0
    %136 = vmatprep.subr.mxu0 0.0
    %137 = vmatpush1.msra.mxu0 0.0
    %138 = vmatprep.subr.mxu0 0.0
    %139 = vmatpush1.msra.mxu0 0.0
    %140 = vmatprep.subr.mxu0 0.0
    %141 = vmatpush1.msra.mxu0 0.0
    %142 = vmatprep.subr.mxu0 0.0
    %143 = vmatpush1.msra.mxu0 0.0
    %144 = vmatprep.subr.mxu0 0.0
    %145 = vmatpush1.msra.mxu0 0.0
    %146 = vmatprep.subr.mxu0 0.0
    %147 = vmatpush1.msra.mxu0 0.0
    %148 = vmatprep.subr.mxu0 0.0
    %149 = vmatpush1.msra.mxu0 0.0
    %150 = vmatprep.subr.mxu0 0.0
    %151 = vmatpush1.msra.mxu0 0.0
    %152 = vmatprep.subr.mxu0 0.0
    %153 = vmatpush1.msra.mxu0 0.0
    %154 = vmatprep.subr.mxu0 0.0
    %155 = vmatpush1.msra.mxu0 0.0
    %156 = vmatprep.subr.mxu0 0.0
    %157 = vmatpush1.msra.mxu0 0.0
    %158 = vmatprep.subr.mxu0 0.0
    %159 = vmatpush1.msra.mxu0 0.0
    %160 = vmatprep.subr.mxu0 0.0
    %161 = vmatpush1.msra.mxu0 0.0
    %162 = vmatprep.subr.mxu0 0.0
    %163 = vmatpush1.msra.mxu0 0.0
    %164 = vmatprep.subr.mxu0 0.0
    %165 = vmatpush1.msra.mxu0 0.0
    %166 = vmatprep.subr.mxu0 0.0
    %167 = vmatpush1.msra.mxu0 0.0
    %168 = vmatprep.subr.mxu0 0.0
    %169 = vmatpush1.msra.mxu0 0.0
    %170 = vmatprep.subr.mxu0 0.0
    %171 = vmatpush1.msra.mxu0 0.0
    %172 = vmatprep.subr.mxu0 0.0
    %173 = vmatpush1.msra.mxu0 0.0
    %174 = vmatprep.subr.mxu0 0.0
    %175 = vmatpush1.msra.mxu0 0.0
    %176 = vmatprep.mubr.f32.mxu0 0.0
    %177 = vmatmul.mubr.f32.gmra.mrb[0].mxu0 %v107
    %v178 = vpop.f32.mrb[0].mxu0
    %v179 = vadd.f32 0.0, %v178
    %v180 = vpop.f32.mrb[0].mxu0
    %181 = vmatprep.mubr.f32.mxu0 0.0
    %182 = vmatmul.mubr.f32.gmra.mrb[0].mxu0 %v110
    %v183 = vpop.f32.mrb[0].mxu0
    %v184 = vadd.f32 0.0, %v183
    %v185 = vpop.f32.mrb[0].mxu0
    %186 = vdwg.mxu0
    %187 = vst.msk [vmem:[#allocation2] sm:$0xff] %vm21, %v179
    %188 = vst.msk [vmem:[#allocation2 + $0x8] sm:$0xff] %vm21, %v184
    // Predicated region
    $region14: #{tpu_custom_call.1} parent=1 // pred_check
      _
    $region15: #{tpu_custom_call.1} parent=1 // pred_check_branch
      %190 = sbr.rel (0) target = $region17
    $region16: #{tpu_custom_call.1} parent=1 // pred_region
      %s192 = ssub.s32 256, 256
      %193 = vsyncadd [#allocation3], %s192
      %s194 = sshll.u32 [#allocation2], 4
      %s195 = int_to_ptr.vmem [resolvable:$true] %s194
      %200 = dma.vmem_to_hbm [thread:$0]  %s195, 256, %s3, [#allocation3], 128, 128, 8
    $region17: #{tpu_custom_call.1} parent=1 // pred_fallthru
      _
    // Predicated region
    $region18: #{tpu_custom_call.1} parent=1 // pred_check
      _
    $region19: #{tpu_custom_call.1} parent=1 // pred_check_branch
      %202 = sbr.rel (0) target = $region21
    $region20: #{tpu_custom_call.1} parent=1 // pred_region
      %203 = dma.done [#allocation3], 256
    $region21: #{tpu_custom_call.1} parent=1 // pred_fallthru
      _
    %204 = vsyncpa [#allocation3], 1

</llo_original>
